<compile_context>
chip_gen: v6e
topology: v6e:2x2x1
jax: 0.10.0
libtpu: 0.0.40
codegen_flags: <defaults>
</compile_context>

<pallas_src>
import jax
import jax.numpy as jnp
from jax.experimental import pallas as pl
from jax.experimental.pallas import tpu as pltpu


def _copy_kernel(x_ref, o_ref):
    # Entire hot path of Net.forward is `return x`: one full-tile VMEM copy.
    o_ref[...] = x_ref[...]


def _lane_dense_2d(total: int) -> tuple[int, int]:
    """Pick a (rows, lanes) factorization with lanes a multiple of 128."""
    for lanes in (1024, 512, 256, 128):
        if total % lanes == 0:
            return total // lanes, lanes
    # Fallback: single row with full extent (full-array-dims escape hatch).
    return 1, total


def _tile_rows(rows: int, lanes: int, itemsize: int,
               budget_bytes: int = 2 * 1024 * 1024) -> int:
    """Largest divisor of `rows` whose tile fits the per-buffer VMEM budget."""
    max_rows = max(1, budget_bytes // max(1, lanes * itemsize))
    tile = min(rows, max_rows)
    while rows % tile != 0:
        tile -= 1
    return tile


# Below this size a single resident VMEM block (no grid) is cheapest.
_SMALL_BYTES = 4 * 1024 * 1024


@jax.jit
def net_forward(x: jax.Array) -> jax.Array:
    """Pallas implementation of Net.forward (identity pass-through)."""
    orig_shape = x.shape
    total = x.size
    itemsize = jnp.dtype(x.dtype).itemsize

    rows, lanes = _lane_dense_2d(total)
    x2 = x.reshape(rows, lanes)  # layout plumbing only; semantics unchanged

    if total * itemsize <= _SMALL_BYTES:
        # Tiny input: whole array as one VMEM-resident block, no grid loop,
        # output aliased onto the input buffer.
        y2 = pl.pallas_call(
            _copy_kernel,
            out_shape=jax.ShapeDtypeStruct((rows, lanes), x.dtype),
            in_specs=[pl.BlockSpec(memory_space=pltpu.MemorySpace.VMEM)],
            out_specs=pl.BlockSpec(memory_space=pltpu.MemorySpace.VMEM),
            input_output_aliases={0: 0},
        )(x2)
    else:
        # Large input: real pipelined 1-D grid over rows.  Tiles are capped at
        # ~2 MiB so double-buffered in+out (4x) stays well inside the 32 MiB
        # scoped VMEM default even on v7x; "parallel" lets v7x shard the copy
        # across both TensorCores (harmless no-op on single-TC v5e/v6e).
        tr = _tile_rows(rows, lanes, itemsize)
        y2 = pl.pallas_call(
            _copy_kernel,
            out_shape=jax.ShapeDtypeStruct((rows, lanes), x.dtype),
            grid=(rows // tr,),
            in_specs=[pl.BlockSpec((tr, lanes), lambda i: (i, 0))],
            out_specs=pl.BlockSpec((tr, lanes), lambda i: (i, 0)),
            input_output_aliases={0: 0},
            compiler_params=pltpu.CompilerParams(
                dimension_semantics=("parallel",),
                vmem_limit_bytes=32 * 1024 * 1024,
            ),
        )(x2)

    return y2.reshape(orig_shape)


if __name__ == "__main__":
    # Net.__init__(backbone, n_classes) registers no parameters and forward()
    # ignores them entirely, so there are no weights to initialize here.
    key = jax.random.PRNGKey(0)
    x = jax.random.normal(key, (2, 4, 16, 16), dtype=jnp.float32)

    y = net_forward(x)
    y = jax.block_until_ready(y)

    assert y.shape == x.shape and y.dtype == x.dtype
    assert bool(jnp.all(y == x))
    print("KERNEL_OK")
</pallas_src>

<mosaic_0001>
module attributes {stable_mosaic.version = 11 : i64} {
  func.func @_copy_kernel(%arg0: memref<2x1024xf32, #tpu.memory_space<vmem>>, %arg1: memref<2x1024xf32, #tpu.memory_space<vmem>>) attributes {dimension_semantics = [], scalar_prefetch = 0 : i64, scratch_operands = 0 : i64, tpu.core_type = #tpu.core_type<tc>} {
    %c0 = arith.constant 0 : index
    %c0_0 = arith.constant 0 : index
    %0 = vector.load %arg0[%c0, %c0_0] : memref<2x1024xf32, #tpu.memory_space<vmem>>, vector<2x1024xf32>
    %c0_1 = arith.constant 0 : index
    %c0_2 = arith.constant 0 : index
    %1 = vector.load %arg1[%c0_1, %c0_2] : memref<2x1024xf32, #tpu.memory_space<vmem>>, vector<2x1024xf32>
    tpu.vector_store %arg1[%c0_1, %c0_2], %0 {strides = array<i32>} : memref<2x1024xf32, #tpu.memory_space<vmem>>, vector<2x1024xf32>,
    return
  }
}

</mosaic_0001>

<llo_original>
// kernel: net_forward.1
$region0: #{net_forward.1}
  #allocation0 [shape = 'u32[]', space=smem, size = 0x4, offset = 0x4, fixed_abs, tag = 'smem constant byte address 0x4 - core index']
  #allocation1 [shape = 'u32[144,128]{1,0:T(1,128)}', space=vmem, size = 0x12000, scoped, tag = 'internal scratch']
  %s0 = inlined_call_operand.vmem [shape: f32[2,1024], index: 0, kind: input, shape index: {}, may-alias: {0,1}]
  %s1 = inlined_call_operand.vmem [shape: f32[2,1024], index: 1, kind: output, shape index: {}, may-alias: {0,1}]
  %s2 = sld [smem:[#allocation0]]
  $region14: #{net_forward.1} parent=0
    _
  %s4 = ssub.s32 1, %s2
  %s5 = scalar_select 0, %s4, %s2
  // Predicated region
  $region2: #{net_forward.1} parent=0 // pred_check
    _
  $region3: #{net_forward.1} parent=0 // pred_check_branch
    %7 = sbr.rel (0) target = $region5
  $region4: #{net_forward.1} parent=0 // pred_region
    _
  $region5: #{net_forward.1} parent=0 // pred_fallthru
    _
  %v8 = vld [vmem:[%s0] sm:$0xff]
  %v9 = vld [vmem:[%s0 + $0x8] sm:$0xff]
  %10 = vst [vmem:[%s1] sm:$0xff] %v8
  %11 = vst [vmem:[%s1 + $0x8] sm:$0xff] %v9
  // Predicated region
  $region6: #{net_forward.1} parent=0 // pred_check
    _
  $region7: #{net_forward.1} parent=0 // pred_check_branch
    %13 = sbr.rel (0) target = $region9
  $region8: #{net_forward.1} parent=0 // pred_region
    _
  $region9: #{net_forward.1} parent=0 // pred_fallthru
    _
  // Predicated region
  $region10: #{net_forward.1} parent=0 // pred_check
    _
  $region11: #{net_forward.1} parent=0 // pred_check_branch
    %15 = sbr.rel (0) target = $region13
  $region12: #{net_forward.1} parent=0 // pred_region
    _
  $region13: #{net_forward.1} parent=0 // pred_fallthru
    _

</llo_original>
